<compile_context>
chip_gen: v7x
topology: tpu7x:2x2x1
jax: 0.10.0
libtpu: 0.0.40
codegen_flags: <defaults>
</compile_context>

<pallas_src>
import jax
import jax.numpy as jnp
from jax.experimental import pallas as pl
from jax.experimental.pallas import tpu as pltpu


def _round_up(x, m):
    return ((x + m - 1) // m) * m


def _cdiv(a, b):
    return (a + b - 1) // b


# ---------------------------------------------------------------------------
# Fused kernel: gather+mean prologue (grid step 0) + vocab-tiled GEMV + bias.
# ---------------------------------------------------------------------------
def _cbow_kernel(ctx_ref, emb_hbm, w_ref, b_ref, out_ref, avg_ref, rows_ref, sem):
    # ctx_ref : (C,)         int32   SMEM (scalar-prefetched context indices)
    # emb_hbm : (Vr, Dp)     float32 HBM/ANY padded embedding table
    # w_ref   : (Dp, TILE_V) bf16    VMEM streamed W^T tile
    # b_ref   : (1, TILE_V)  float32 VMEM bias tile
    # out_ref : (1, TILE_V)  float32 VMEM logits tile
    # avg_ref : (1, Dp)      float32 VMEM scratch (persists across vocab tiles)
    # rows_ref: (C, Dp)      float32 VMEM scratch (gathered embedding rows)
    # sem     : (C,)         DMA semaphores
    C = rows_ref.shape[0]

    # Prologue: only on the first vocab tile.  The vocab grid axis is marked
    # "arbitrary" (sequential) so avg_ref written here persists for all tiles.
    @pl.when(pl.program_id(0) == 0)
    def _gather_and_mean():
        copies = []
        for i in range(C):                                  # C is tiny -> static unroll
            cp = pltpu.make_async_copy(
                emb_hbm.at[pl.ds(ctx_ref[i], 1), :],        # one (1, Dp) row from HBM
                rows_ref.at[pl.ds(i, 1), :],
                sem.at[i])
            cp.start()
            copies.append(cp)
        for cp in copies:                                   # waits after all starts
            cp.wait()
        # mean over the context dimension; 1/C folded into the single reduction.
        avg_ref[...] = jnp.sum(rows_ref[...], axis=0, keepdims=True) * (1.0 / C)

    # (1, Dp) @ (Dp, TILE_V): bf16 x bf16 on the MXU with f32 accumulation.
    out_ref[...] = (
        jnp.dot(avg_ref[...].astype(jnp.bfloat16), w_ref[...],
                preferred_element_type=jnp.float32)
        + b_ref[...])


# ---------------------------------------------------------------------------
# One-time parameter preparation (hoisted out of the per-call path).
# ---------------------------------------------------------------------------
def _choose_tile_v(V, Dp, w_bytes):
    # Per-buffer W-tile budget sized so double-buffering stays well inside the
    # most constrained scoped-VMEM default (v5e: 16 MiB); larger chips simply
    # finish in fewer, bigger steps.
    budget_per_buf = 6 << 20
    tile_max = max(128, ((budget_per_buf // (Dp * w_bytes)) // 128) * 128)
    tile_max = min(tile_max, 8192)
    # Minimize dead padded columns: smallest 128-multiple tile that covers V in
    # the same number of tiles tile_max would need (<=127 padded cols per call).
    n_tiles = _cdiv(V, tile_max)
    return _round_up(_cdiv(V, n_tiles), 128)


def prepare_cbow_params(emb_table, linear_w, linear_b):
    V, D = emb_table.shape
    Dp = _round_up(D, 128)                       # lane-pad the feature dim
    TILE_V = _choose_tile_v(V, Dp, w_bytes=2)    # bf16 weight stream
    Vp = _round_up(V, TILE_V)                    # vocab padded to whole tiles
    Vr = _round_up(V, 8)                         # row-pad the embedding table

    emb_p = jnp.zeros((Vr, Dp), jnp.float32).at[:V, :D].set(
        emb_table.astype(jnp.float32))
    w_t_p = jnp.zeros((Dp, Vp), jnp.bfloat16).at[:D, :V].set(
        linear_w.T.astype(jnp.bfloat16))
    b_p = jnp.zeros((1, Vp), jnp.float32).at[0, :V].set(
        linear_b.astype(jnp.float32))
    return dict(emb=emb_p, w_t=w_t_p, b=b_p,
                vocab_size=V, Dp=Dp, Vp=Vp, tile_v=TILE_V)


def cbow_forward(context, params):
    """context: (C,) int indices. Returns (1, V) logits (float32)."""
    C = context.shape[0]
    V = params["vocab_size"]
    Dp, Vp, TILE_V = params["Dp"], params["Vp"], params["tile_v"]

    # Bounds-safe DMA offsets (an OOB index must never drive a row DMA).
    ctx = jnp.clip(context.astype(jnp.int32), 0, V - 1)

    n_tiles = Vp // TILE_V

    # Explicit VMEM budget: double-buffered W/bias/out tiles + gather scratch
    # + slack for compiler internals (sublane padding accounted for).
    vmem_limit = int(
        2 * (Dp * TILE_V * 2 + 8 * TILE_V * 4 + 8 * TILE_V * 4)
        + (_round_up(C, 8) + 8) * Dp * 4
        + (4 << 20))

    out_padded = pl.pallas_call(
        _cbow_kernel,
        out_shape=jax.ShapeDtypeStruct((1, Vp), jnp.float32),
        grid_spec=pltpu.PrefetchScalarGridSpec(
            num_scalar_prefetch=1,
            grid=(n_tiles,),
            in_specs=[
                pl.BlockSpec(memory_space=pl.ANY),                      # emb table (HBM)
                pl.BlockSpec((Dp, TILE_V), lambda j, ctx_s: (0, j)),    # W^T tile (bf16)
                pl.BlockSpec((1, TILE_V), lambda j, ctx_s: (0, j)),     # bias tile
            ],
            out_specs=pl.BlockSpec((1, TILE_V), lambda j, ctx_s: (0, j)),
            scratch_shapes=[
                pltpu.VMEM((1, Dp), jnp.float32),      # avg embedding (persists)
                pltpu.VMEM((C, Dp), jnp.float32),      # gathered rows
                pltpu.SemaphoreType.DMA((C,)),
            ]),
        compiler_params=pltpu.CompilerParams(
            dimension_semantics=("arbitrary",),        # scratch carried across tiles
            vmem_limit_bytes=vmem_limit),
    )(ctx, params["emb"], params["w_t"], params["b"])

    return out_padded[:, :V]    # (1, V)


if __name__ == "__main__":
    vocab_size = 5
    embedding_dim = 100
    context_len = 4   # CBOW context window (e.g. 2 words each side)

    key = jax.random.PRNGKey(0)
    k_emb, k_w, k_b, k_ctx = jax.random.split(key, 4)

    # nn.Embedding default init: N(0, 1)
    emb_table = jax.random.normal(k_emb, (vocab_size, embedding_dim), jnp.float32)
    # nn.Linear default init: U(-1/sqrt(fan_in), 1/sqrt(fan_in))
    bound = 1.0 / (embedding_dim ** 0.5)
    linear_w = jax.random.uniform(k_w, (vocab_size, embedding_dim), jnp.float32,
                                  minval=-bound, maxval=bound)
    linear_b = jax.random.uniform(k_b, (vocab_size,), jnp.float32,
                                  minval=-bound, maxval=bound)

    context = jax.random.randint(k_ctx, (context_len,), 0, vocab_size, jnp.int32)

    params = prepare_cbow_params(emb_table, linear_w, linear_b)   # once, at init
    out = cbow_forward(context, params)
    out = jax.block_until_ready(out)

    # Pure-JAX f32 reference of the same math (weights are bf16 in the kernel,
    # accumulated in f32, so the tolerance is relaxed accordingly).
    ref = jnp.mean(emb_table[context], axis=0, keepdims=True) @ linear_w.T + linear_b
    assert out.shape == (1, vocab_size)
    assert jnp.allclose(out, ref, atol=2e-2, rtol=2e-2), (out, ref)

    print("KERNEL_OK")
</pallas_src>

<mosaic_0001>
module attributes {stable_mosaic.version = 11 : i64} {
  func.func @_cbow_kernel(%arg0: i32, %arg1: memref<4xi32, #tpu.memory_space<smem>>, %arg2: memref<8x128xf32, #tpu.memory_space<any>>, %arg3: memref<128x128xbf16, #tpu.memory_space<vmem>>, %arg4: memref<1x128xf32, #tpu.memory_space<vmem>>, %arg5: memref<1x128xf32, #tpu.memory_space<vmem>>, %arg6: memref<1x128xf32, #tpu.memory_space<vmem>>, %arg7: memref<4x128xf32, #tpu.memory_space<vmem>>, %arg8: memref<4x!tpu.dma_semaphore, #tpu.memory_space<semaphore_mem>>) attributes {dimension_semantics = [#tpu.dimension_semantics<arbitrary>], iteration_bounds = array<i64: 1>, scalar_prefetch = 1 : i64, scratch_operands = 3 : i64, tpu.core_type = #tpu.core_type<tc>, window_params = [{}, {transform_indices = @transform_1, window_bounds = array<i64: 128, 128>}, {transform_indices = @transform_2, window_bounds = array<i64: 1, 128>}, {transform_indices = @transform_3, window_bounds = array<i64: 1, 128>}]} {
    %c0_i32 = arith.constant 0 : i32
    %0 = arith.cmpi eq, %arg0, %c0_i32 : i32
    %1 = arith.extui %0 : i1 to i32
    %c0_i32_0 = arith.constant 0 : i32
    %2 = arith.cmpi ne, %1, %c0_i32_0 : i32
    scf.if %2 {
      %c0_8 = arith.constant 0 : index
      %10 = memref.load %arg1[%c0_8] : memref<4xi32, #tpu.memory_space<smem>>
      %c0_i32_9 = arith.constant 0 : i32
      %c0_i32_10 = arith.constant 0 : i32
      %11 = tpu.memref_slice %arg2[%10, %c0_i32_10] : memref<8x128xf32, #tpu.memory_space<any>> -> memref<1x128xf32, #tpu.memory_space<any>>
      %c0_i32_11 = arith.constant 0 : i32
      %c0_i32_12 = arith.constant 0 : i32
      %12 = tpu.memref_slice %arg7[%c0_i32_11, %c0_i32_12] : memref<4x128xf32, #tpu.memory_space<vmem>> -> memref<1x128xf32, #tpu.memory_space<vmem>>
      %13 = tpu.memref_slice %arg8[%c0_i32_9] : memref<4x!tpu.dma_semaphore, #tpu.memory_space<semaphore_mem>> -> memref<1x!tpu.dma_semaphore, #tpu.memory_space<semaphore_mem>>
      %14 = tpu.memref_squeeze %13 : memref<1x!tpu.dma_semaphore, #tpu.memory_space<semaphore_mem>> -> memref<!tpu.dma_semaphore, #tpu.memory_space<semaphore_mem>>
      tpu.enqueue_dma source(%11 : memref<1x128xf32, #tpu.memory_space<any>>) target(%12 : memref<1x128xf32, #tpu.memory_space<vmem>>) target_semaphore(%14 : memref<!tpu.dma_semaphore, #tpu.memory_space<semaphore_mem>>)
      %c1 = arith.constant 1 : index
      %15 = memref.load %arg1[%c1] : memref<4xi32, #tpu.memory_space<smem>>
      %c1_i32 = arith.constant 1 : i32
      %c0_i32_13 = arith.constant 0 : i32
      %16 = tpu.memref_slice %arg2[%15, %c0_i32_13] : memref<8x128xf32, #tpu.memory_space<any>> -> memref<1x128xf32, #tpu.memory_space<any>>
      %c1_i32_14 = arith.constant 1 : i32
      %c0_i32_15 = arith.constant 0 : i32
      %17 = tpu.memref_slice %arg7[%c1_i32_14, %c0_i32_15] : memref<4x128xf32, #tpu.memory_space<vmem>> -> memref<1x128xf32, #tpu.memory_space<vmem>>
      %18 = tpu.memref_slice %arg8[%c1_i32] : memref<4x!tpu.dma_semaphore, #tpu.memory_space<semaphore_mem>> -> memref<1x!tpu.dma_semaphore, #tpu.memory_space<semaphore_mem>>
      %19 = tpu.memref_squeeze %18 : memref<1x!tpu.dma_semaphore, #tpu.memory_space<semaphore_mem>> -> memref<!tpu.dma_semaphore, #tpu.memory_space<semaphore_mem>>
      tpu.enqueue_dma source(%16 : memref<1x128xf32, #tpu.memory_space<any>>) target(%17 : memref<1x128xf32, #tpu.memory_space<vmem>>) target_semaphore(%19 : memref<!tpu.dma_semaphore, #tpu.memory_space<semaphore_mem>>)
      %c2 = arith.constant 2 : index
      %20 = memref.load %arg1[%c2] : memref<4xi32, #tpu.memory_space<smem>>
      %c2_i32 = arith.constant 2 : i32
      %c0_i32_16 = arith.constant 0 : i32
      %21 = tpu.memref_slice %arg2[%20, %c0_i32_16] : memref<8x128xf32, #tpu.memory_space<any>> -> memref<1x128xf32, #tpu.memory_space<any>>
      %c2_i32_17 = arith.constant 2 : i32
      %c0_i32_18 = arith.constant 0 : i32
      %22 = tpu.memref_slice %arg7[%c2_i32_17, %c0_i32_18] : memref<4x128xf32, #tpu.memory_space<vmem>> -> memref<1x128xf32, #tpu.memory_space<vmem>>
      %23 = tpu.memref_slice %arg8[%c2_i32] : memref<4x!tpu.dma_semaphore, #tpu.memory_space<semaphore_mem>> -> memref<1x!tpu.dma_semaphore, #tpu.memory_space<semaphore_mem>>
      %24 = tpu.memref_squeeze %23 : memref<1x!tpu.dma_semaphore, #tpu.memory_space<semaphore_mem>> -> memref<!tpu.dma_semaphore, #tpu.memory_space<semaphore_mem>>
      tpu.enqueue_dma source(%21 : memref<1x128xf32, #tpu.memory_space<any>>) target(%22 : memref<1x128xf32, #tpu.memory_space<vmem>>) target_semaphore(%24 : memref<!tpu.dma_semaphore, #tpu.memory_space<semaphore_mem>>)
      %c3 = arith.constant 3 : index
      %25 = memref.load %arg1[%c3] : memref<4xi32, #tpu.memory_space<smem>>
      %c3_i32 = arith.constant 3 : i32
      %c0_i32_19 = arith.constant 0 : i32
      %26 = tpu.memref_slice %arg2[%25, %c0_i32_19] : memref<8x128xf32, #tpu.memory_space<any>> -> memref<1x128xf32, #tpu.memory_space<any>>
      %c3_i32_20 = arith.constant 3 : i32
      %c0_i32_21 = arith.constant 0 : i32
      %27 = tpu.memref_slice %arg7[%c3_i32_20, %c0_i32_21] : memref<4x128xf32, #tpu.memory_space<vmem>> -> memref<1x128xf32, #tpu.memory_space<vmem>>
      %28 = tpu.memref_slice %arg8[%c3_i32] : memref<4x!tpu.dma_semaphore, #tpu.memory_space<semaphore_mem>> -> memref<1x!tpu.dma_semaphore, #tpu.memory_space<semaphore_mem>>
      %29 = tpu.memref_squeeze %28 : memref<1x!tpu.dma_semaphore, #tpu.memory_space<semaphore_mem>> -> memref<!tpu.dma_semaphore, #tpu.memory_space<semaphore_mem>>
      tpu.enqueue_dma source(%26 : memref<1x128xf32, #tpu.memory_space<any>>) target(%27 : memref<1x128xf32, #tpu.memory_space<vmem>>) target_semaphore(%29 : memref<!tpu.dma_semaphore, #tpu.memory_space<semaphore_mem>>)
      %c0_i32_22 = arith.constant 0 : i32
      %c0_i32_23 = arith.constant 0 : i32
      %30 = tpu.memref_slice %arg2[%10, %c0_i32_23] : memref<8x128xf32, #tpu.memory_space<any>> -> memref<1x128xf32, #tpu.memory_space<any>>
      %c0_i32_24 = arith.constant 0 : i32
      %c0_i32_25 = arith.constant 0 : i32
      %31 = tpu.memref_slice %arg7[%c0_i32_24, %c0_i32_25] : memref<4x128xf32, #tpu.memory_space<vmem>> -> memref<1x128xf32, #tpu.memory_space<vmem>>
      %32 = tpu.memref_slice %arg8[%c0_i32_22] : memref<4x!tpu.dma_semaphore, #tpu.memory_space<semaphore_mem>> -> memref<1x!tpu.dma_semaphore, #tpu.memory_space<semaphore_mem>>
      %33 = tpu.memref_squeeze %32 : memref<1x!tpu.dma_semaphore, #tpu.memory_space<semaphore_mem>> -> memref<!tpu.dma_semaphore, #tpu.memory_space<semaphore_mem>>
      tpu.wait_dma2 semaphore(%33 : memref<!tpu.dma_semaphore, #tpu.memory_space<semaphore_mem>>) src(%30 : memref<1x128xf32, #tpu.memory_space<any>>) dst(%31 : memref<1x128xf32, #tpu.memory_space<vmem>>)
      %c1_i32_26 = arith.constant 1 : i32
      %c0_i32_27 = arith.constant 0 : i32
      %34 = tpu.memref_slice %arg2[%15, %c0_i32_27] : memref<8x128xf32, #tpu.memory_space<any>> -> memref<1x128xf32, #tpu.memory_space<any>>
      %c1_i32_28 = arith.constant 1 : i32
      %c0_i32_29 = arith.constant 0 : i32
      %35 = tpu.memref_slice %arg7[%c1_i32_28, %c0_i32_29] : memref<4x128xf32, #tpu.memory_space<vmem>> -> memref<1x128xf32, #tpu.memory_space<vmem>>
      %36 = tpu.memref_slice %arg8[%c1_i32_26] : memref<4x!tpu.dma_semaphore, #tpu.memory_space<semaphore_mem>> -> memref<1x!tpu.dma_semaphore, #tpu.memory_space<semaphore_mem>>
      %37 = tpu.memref_squeeze %36 : memref<1x!tpu.dma_semaphore, #tpu.memory_space<semaphore_mem>> -> memref<!tpu.dma_semaphore, #tpu.memory_space<semaphore_mem>>
      tpu.wait_dma2 semaphore(%37 : memref<!tpu.dma_semaphore, #tpu.memory_space<semaphore_mem>>) src(%34 : memref<1x128xf32, #tpu.memory_space<any>>) dst(%35 : memref<1x128xf32, #tpu.memory_space<vmem>>)
      %c2_i32_30 = arith.constant 2 : i32
      %c0_i32_31 = arith.constant 0 : i32
      %38 = tpu.memref_slice %arg2[%20, %c0_i32_31] : memref<8x128xf32, #tpu.memory_space<any>> -> memref<1x128xf32, #tpu.memory_space<any>>
      %c2_i32_32 = arith.constant 2 : i32
      %c0_i32_33 = arith.constant 0 : i32
      %39 = tpu.memref_slice %arg7[%c2_i32_32, %c0_i32_33] : memref<4x128xf32, #tpu.memory_space<vmem>> -> memref<1x128xf32, #tpu.memory_space<vmem>>
      %40 = tpu.memref_slice %arg8[%c2_i32_30] : memref<4x!tpu.dma_semaphore, #tpu.memory_space<semaphore_mem>> -> memref<1x!tpu.dma_semaphore, #tpu.memory_space<semaphore_mem>>
      %41 = tpu.memref_squeeze %40 : memref<1x!tpu.dma_semaphore, #tpu.memory_space<semaphore_mem>> -> memref<!tpu.dma_semaphore, #tpu.memory_space<semaphore_mem>>
      tpu.wait_dma2 semaphore(%41 : memref<!tpu.dma_semaphore, #tpu.memory_space<semaphore_mem>>) src(%38 : memref<1x128xf32, #tpu.memory_space<any>>) dst(%39 : memref<1x128xf32, #tpu.memory_space<vmem>>)
      %c3_i32_34 = arith.constant 3 : i32
      %c0_i32_35 = arith.constant 0 : i32
      %42 = tpu.memref_slice %arg2[%25, %c0_i32_35] : memref<8x128xf32, #tpu.memory_space<any>> -> memref<1x128xf32, #tpu.memory_space<any>>
      %c3_i32_36 = arith.constant 3 : i32
      %c0_i32_37 = arith.constant 0 : i32
      %43 = tpu.memref_slice %arg7[%c3_i32_36, %c0_i32_37] : memref<4x128xf32, #tpu.memory_space<vmem>> -> memref<1x128xf32, #tpu.memory_space<vmem>>
      %44 = tpu.memref_slice %arg8[%c3_i32_34] : memref<4x!tpu.dma_semaphore, #tpu.memory_space<semaphore_mem>> -> memref<1x!tpu.dma_semaphore, #tpu.memory_space<semaphore_mem>>
      %45 = tpu.memref_squeeze %44 : memref<1x!tpu.dma_semaphore, #tpu.memory_space<semaphore_mem>> -> memref<!tpu.dma_semaphore, #tpu.memory_space<semaphore_mem>>
      tpu.wait_dma2 semaphore(%45 : memref<!tpu.dma_semaphore, #tpu.memory_space<semaphore_mem>>) src(%42 : memref<1x128xf32, #tpu.memory_space<any>>) dst(%43 : memref<1x128xf32, #tpu.memory_space<vmem>>)
      %c0_38 = arith.constant 0 : index
      %c0_39 = arith.constant 0 : index
      %46 = vector.load %arg7[%c0_38, %c0_39] : memref<4x128xf32, #tpu.memory_space<vmem>>, vector<4x128xf32>
      %cst_40 = arith.constant dense<0.000000e+00> : vector<128xf32>
      %47 = vector.multi_reduction <add>, %46, %cst_40 [0] : vector<4x128xf32> to vector<128xf32>
      %48 = vector.shape_cast %47 : vector<128xf32> to vector<1x128xf32>
      %cst_41 = arith.constant 2.500000e-01 : f32
      %49 = vector.broadcast %cst_41 : f32 to vector<1x128xf32>
      %50 = arith.mulf %48, %49 : vector<1x128xf32>
      %c0_42 = arith.constant 0 : index
      %c0_43 = arith.constant 0 : index
      %51 = vector.load %arg6[%c0_42, %c0_43] : memref<1x128xf32, #tpu.memory_space<vmem>>, vector<1x128xf32>
      tpu.vector_store %arg6[%c0_42, %c0_43], %50 {strides = array<i32>} : memref<1x128xf32, #tpu.memory_space<vmem>>, vector<1x128xf32>,
    } else {
    }
    %c0 = arith.constant 0 : index
    %c0_1 = arith.constant 0 : index
    %3 = vector.load %arg6[%c0, %c0_1] : memref<1x128xf32, #tpu.memory_space<vmem>>, vector<1x128xf32>
    %4 = arith.truncf %3 : vector<1x128xf32> to vector<1x128xbf16>
    %c0_2 = arith.constant 0 : index
    %c0_3 = arith.constant 0 : index
    %5 = vector.load %arg3[%c0_2, %c0_3] : memref<128x128xbf16, #tpu.memory_space<vmem>>, vector<128x128xbf16>
    %cst = arith.constant dense<0.000000e+00> : vector<1x128xf32>
    %6 = tpu.matmul %4, %5, %cst {dimension_numbers = #tpu.dot_dimension_numbers<[1], [0], [0], [1], [0, 0, 1, 1], [], []>} : vector<1x128xbf16>, vector<128x128xbf16>, vector<1x128xf32> -> vector<1x128xf32>
    %c0_4 = arith.constant 0 : index
    %c0_5 = arith.constant 0 : index
    %7 = vector.load %arg4[%c0_4, %c0_5] : memref<1x128xf32, #tpu.memory_space<vmem>>, vector<1x128xf32>
    %8 = arith.addf %6, %7 : vector<1x128xf32>
    %c0_6 = arith.constant 0 : index
    %c0_7 = arith.constant 0 : index
    %9 = vector.load %arg5[%c0_6, %c0_7] : memref<1x128xf32, #tpu.memory_space<vmem>>, vector<1x128xf32>
    tpu.vector_store %arg5[%c0_6, %c0_7], %8 {strides = array<i32>} : memref<1x128xf32, #tpu.memory_space<vmem>>, vector<1x128xf32>,
    return
  }
  func.func @transform_1(%arg0: i32, %arg1: memref<4xi32, #tpu.memory_space<smem>>) -> (i32, i32) {
    %c0_i32 = arith.constant 0 : i32
    %c0_i32_0 = arith.constant 0 : i32
    return %c0_i32, %arg0 : i32, i32
  }
  func.func @transform_2(%arg0: i32, %arg1: memref<4xi32, #tpu.memory_space<smem>>) -> (i32, i32) {
    %c0_i32 = arith.constant 0 : i32
    %c0_i32_0 = arith.constant 0 : i32
    return %c0_i32, %arg0 : i32, i32
  }
  func.func @transform_3(%arg0: i32, %arg1: memref<4xi32, #tpu.memory_space<smem>>) -> (i32, i32) {
    %c0_i32 = arith.constant 0 : i32
    %c0_i32_0 = arith.constant 0 : i32
    return %c0_i32, %arg0 : i32, i32
  }
}

</mosaic_0001>

<llo_original>
// kernel: tpu_custom_call.1
$region0: #{tpu_custom_call.1}
  #allocation0 [shape = 'u32[]', space=smem, size = 0x4, offset = 0x4, fixed_abs, tag = 'smem constant byte address 0x4 - core index']
  #allocation1 [shape = 'u32[144,128]{1,0:T(1,128)}', space=vmem, size = 0x12000, scoped, tag = 'internal scratch']
  #allocation2 [shape = 'f32[1,128]{1,0:T(1,128)}', space=vmem, size = 0x200, scoped, tag = 'scratch operand']
  #allocation3 [shape = 'f32[4,128]{1,0:T(4,128)}', space=vmem, size = 0x800, scoped, tag = 'scratch operand']
  #allocation4 [shape = 's32[4]{0}', space=sflag, size = 0x10, scoped, tag = 'scratch operand']
  #allocation5 [shape = 's32[1]{0}', space=sflag, size = 0x4, scoped, tag = 'scoped memory for tpu_custom_call.1']
  #allocation6 [shape = 'u8[512]{0}', space=smem, size = 0x200, scoped, tag = 'prefetched SMEM operand 0']
  #allocation11 [shape = 's32[]', space=sflag, size = 0x4, offset = 0, fixed_abs, tag = 'sflag constant byte address 0x0 - dummy sync flag']
  #allocation12 [shape = 's32[]', space=sflag, size = 0x4, offset = 0, fixed_abs, tag = 'sflag constant byte address 0x0 - dummy sync flag']
  #allocation13 [shape = 'u32[]', space=smem, size = 0x4, offset = 0x44, fixed_abs, tag = 'smem constant byte address 0x44 - assertion arg 0']
  #allocation14 [shape = 'u32[]', space=smem, size = 0x4, offset = 0x48, fixed_abs, tag = 'smem constant byte address 0x48 - assertion arg 1']
  #allocation15 [shape = 's32[]', space=sflag, size = 0x4, offset = 0, fixed_abs, tag = 'sflag constant byte address 0x0 - dummy sync flag']
  #allocation16 [shape = 's32[]', space=sflag, size = 0x4, offset = 0, fixed_abs, tag = 'sflag constant byte address 0x0 - dummy sync flag']
  #allocation17 [shape = 's32[]', space=sflag, size = 0x4, offset = 0, fixed_abs, tag = 'sflag constant byte address 0x0 - dummy sync flag']
  #allocation18 [shape = 's32[]', space=sflag, size = 0x4, offset = 0, fixed_abs, tag = 'sflag constant byte address 0x0 - dummy sync flag']
  #allocation19 [shape = 's32[]', space=sflag, size = 0x4, offset = 0, fixed_abs, tag = 'sflag constant byte address 0x0 - dummy sync flag']
  #allocation20 [shape = 's32[]', space=sflag, size = 0x4, offset = 0, fixed_abs, tag = 'sflag constant byte address 0x0 - dummy sync flag']
  %s0 = inlined_call_operand.hbm [shape: s32[4], index: 0, kind: input, shape index: {}]
  %s1 = inlined_call_operand.hbm [shape: f32[8,128], index: 1, kind: input, shape index: {}]
  %s2 = inlined_call_operand.hbm [shape: bf16[128,128], index: 2, kind: input, shape index: {}]
  %s3 = inlined_call_operand.vmem [shape: f32[1,128], index: 3, kind: input, shape index: {}]
  %s4 = inlined_call_operand.hbm [shape: f32[1,128], index: 4, kind: output, shape index: {}]
  %s5 = sld [smem:[#allocation0]]
  $region42: #{tpu_custom_call.1} parent=0
    _
  %s7 = ssub.s32 1, %s5
  %s8 = scalar_select 0, %s7, %s5
  %10 = dma.hbm_to_smem %s0, 16, [#allocation6], [#allocation5]
  %11 = dma.done [#allocation5], 16
  %12 = sfence
  $region1: #{tpu_custom_call.1} parent=0
    #allocation7 [shape = 'u8[32768]{0}', space=vmem, size = 0x8000, scoped, tag = 'input window, operand 2, single buffered']
    #allocation8 [shape = 's32[1]{0}', space=sflag, size = 0x4, scoped, tag = 'scoped memory for tpu_custom_call.1']
    #allocation9 [shape = 's32[1]{0}', space=sflag, size = 0x4, scoped, tag = 'scoped memory for tpu_custom_call.1']
    #allocation10 [shape = 'u8[512]{0}', space=vmem, size = 0x400, scoped, tag = 'output window, operand 0, single buffered']
    %13 = vsyncpa [#allocation8], 0
    %14 = vsyncpa [#allocation9], 0
    // Predicated region
    $region2: #{tpu_custom_call.1} parent=1 // pred_check
      _
    $region3: #{tpu_custom_call.1} parent=1 // pred_check_branch
      %16 = sbr.rel (0) target = $region5
    $region4: #{tpu_custom_call.1} parent=1 // pred_region
      %s18 = ssub.s32 1024, 1024
      %19 = vsyncadd [#allocation8], %s18
      %s20 = sshll.u32 [#allocation7], 4
      %s21 = int_to_ptr.vmem [resolvable:$true] %s20
      %26 = dma.hbm_to_vmem [thread:$0]  %s2, 1024, %s21, [#allocation8], 64, 64, 4
    $region5: #{tpu_custom_call.1} parent=1 // pred_fallthru
      _
    // Predicated region
    $region6: #{tpu_custom_call.1} parent=1 // pred_check
      _
    $region7: #{tpu_custom_call.1} parent=1 // pred_check_branch
      %28 = sbr.rel (0) target = $region9
    $region8: #{tpu_custom_call.1} parent=1 // pred_region
      _
    $region9: #{tpu_custom_call.1} parent=1 // pred_fallthru
      _
    // Predicated region
    $region10: #{tpu_custom_call.1} parent=1 // pred_check
      _
    $region11: #{tpu_custom_call.1} parent=1 // pred_check_branch
      %30 = sbr.rel (0) target = $region13
    $region12: #{tpu_custom_call.1} parent=1 // pred_region
      %31 = dma.done [#allocation8], 1024
    $region13: #{tpu_custom_call.1} parent=1 // pred_fallthru
      _
    %p33 = scmp.eq.s32.totalorder 0, 0
    // Predicated region
    $region14: #{tpu_custom_call.1} parent=1 // pred_check
      %p34 = pneg %p33
    $region15: #{tpu_custom_call.1} parent=1 // pred_check_branch
      %36 = sbr.rel (%p34) target = $region17
    $region16: #{tpu_custom_call.1} parent=1 // pred_region
      %s37 = sld [smem:[#allocation6]]
      %s38 = smul.addr %s37, 16
      %s39 = scalar_lea.hbm %s1, %s38
      // Predicated region
      $region18: #{tpu_custom_call.1} parent=16 // pred_check
        _
      $region19: #{tpu_custom_call.1} parent=16 // pred_check_branch
        %41 = sbr.rel target = $region21
      $region20: #{tpu_custom_call.1} parent=16 // pred_region
        %42 = sst [smem:[#allocation13]] [#allocation12]
        %43 = sst [smem:[#allocation14]] [#allocation11]
      $region21: #{tpu_custom_call.1} parent=16 // pred_fallthru
        _
      %45 = shalt.err (0)
      %s47 = sshll.u32 [#allocation3], 4
      %s48 = int_to_ptr.vmem [resolvable:$true] %s47
      %50 = dma.hbm_to_vmem [thread:$0]  %s39, 16, %s48, [#allocation4]
      %s51 = sld [smem:[#allocation6 + $0x1]]
      %s52 = smul.addr %s51, 16
      %s53 = scalar_lea.hbm %s1, %s52
      %s54 = scalar_lea.vmem [#allocation3], 1
      %s55 = scalar_lea.sflag [#allocation4], 1
      // Predicated region
      $region22: #{tpu_custom_call.1} parent=16 // pred_check
        _
      $region23: #{tpu_custom_call.1} parent=16 // pred_check_branch
        %57 = sbr.rel target = $region25
      $region24: #{tpu_custom_call.1} parent=16 // pred_region
        %58 = sst [smem:[#allocation13]] [#allocation16]
        %59 = sst [smem:[#allocation14]] [#allocation15]
      $region25: #{tpu_custom_call.1} parent=16 // pred_fallthru
        _
      %61 = shalt.err (0)
      %s63 = sshll.u32 %s54, 4
      %s64 = int_to_ptr.vmem [resolvable:$true] %s63
      %66 = dma.hbm_to_vmem [thread:$0]  %s53, 16, %s64, %s55
      %s67 = sld [smem:[#allocation6 + $0x2]]
      %s68 = smul.addr %s67, 16
      %s69 = scalar_lea.hbm %s1, %s68
      %s70 = scalar_lea.vmem [#allocation3], 2
      %s71 = scalar_lea.sflag [#allocation4], 2
      // Predicated region
      $region26: #{tpu_custom_call.1} parent=16 // pred_check
        _
      $region27: #{tpu_custom_call.1} parent=16 // pred_check_branch
        %73 = sbr.rel target = $region29
      $region28: #{tpu_custom_call.1} parent=16 // pred_region
        %74 = sst [smem:[#allocation13]] [#allocation18]
        %75 = sst [smem:[#allocation14]] [#allocation17]
      $region29: #{tpu_custom_call.1} parent=16 // pred_fallthru
        _
      %77 = shalt.err (0)
      %s79 = sshll.u32 %s70, 4
      %s80 = int_to_ptr.vmem [resolvable:$true] %s79
      %82 = dma.hbm_to_vmem [thread:$0]  %s69, 16, %s80, %s71
      %s83 = sld [smem:[#allocation6 + $0x3]]
      %s84 = smul.addr %s83, 16
      %s85 = scalar_lea.hbm %s1, %s84
      %s86 = scalar_lea.vmem [#allocation3], 3
      %s87 = scalar_lea.sflag [#allocation4], 3
      // Predicated region
      $region30: #{tpu_custom_call.1} parent=16 // pred_check
        _
      $region31: #{tpu_custom_call.1} parent=16 // pred_check_branch
        %89 = sbr.rel target = $region33
      $region32: #{tpu_custom_call.1} parent=16 // pred_region
        %90 = sst [smem:[#allocation13]] [#allocation20]
        %91 = sst [smem:[#allocation14]] [#allocation19]
      $region33: #{tpu_custom_call.1} parent=16 // pred_fallthru
        _
      %93 = shalt.err (0)
      %s95 = sshll.u32 %s86, 4
      %s96 = int_to_ptr.vmem [resolvable:$true] %s95
      %98 = dma.hbm_to_vmem [thread:$0]  %s85, 16, %s96, %s87
      %s99 = smul.u32 1, 1
      %s100 = sshll.u32 %s99, 4
      %101 = dma.done [#allocation4], %s100
      %s102 = sshll.u32 %s99, 4
      %103 = dma.done %s55, %s102
      %s104 = sshll.u32 %s99, 4
      %105 = dma.done %s71, %s104
      %s106 = sshll.u32 %s99, 4
      %107 = dma.done %s87, %s106
      %v108 = vld [vmem:[#allocation3] sm:$0xf]
      %vm109 = vcmask 1043456
      %v110 = vsel %vm109, %v108, 0.0
      %v111 = vrot.slane %v110, 4
      %v112 = vadd.f32 %v110, %v111
      %v113 = vrot.slane %v112, 2
      %v114 = vadd.f32 %v112, %v113
      %v115 = vrot.slane %v114, 1
      %v116 = vadd.f32 %v114, %v115
      %v117 = vmul.f32 %v116, 0.25
      %118 = vst [vmem:[#allocation2] sm:$0x1] %v117
    $region17: #{tpu_custom_call.1} parent=1 // pred_fallthru
      _
    %v119 = vld [vmem:[#allocation2] sm:$0x1]
    %v120 = vpack.c.bf16 %v119, %v119
    %v121 = vld [vmem:[#allocation7] sm:$0xf]
    %v122 = vld [vmem:[#allocation7 + $0x4] sm:$0xf]
    %v123 = vld [vmem:[#allocation7 + $0x8] sm:$0xf]
    %v124 = vld [vmem:[#allocation7 + $0xc] sm:$0xf]
    %v125 = vld [vmem:[#allocation7 + $0x10] sm:$0xf]
    %v126 = vld [vmem:[#allocation7 + $0x14] sm:$0xf]
    %v127 = vld [vmem:[#allocation7 + $0x18] sm:$0xf]
    %v128 = vld [vmem:[#allocation7 + $0x1c] sm:$0xf]
    %v129 = vld [vmem:[#allocation7 + $0x20] sm:$0xf]
    %v130 = vld [vmem:[#allocation7 + $0x24] sm:$0xf]
    %v131 = vld [vmem:[#allocation7 + $0x28] sm:$0xf]
    %v132 = vld [vmem:[#allocation7 + $0x2c] sm:$0xf]
    %v133 = vld [vmem:[#allocation7 + $0x30] sm:$0xf]
    %v134 = vld [vmem:[#allocation7 + $0x34] sm:$0xf]
    %v135 = vld [vmem:[#allocation7 + $0x38] sm:$0xf]
    %v136 = vld [vmem:[#allocation7 + $0x3c] sm:$0xf]
    %v137 = vld [vmem:[%s3] sm:$0x1]
    %v154 = vunpack.c.l.b16 %v121
    %v155 = vunpack.c.l.b16 %v122
    %v156 = vunpack.c.l.b16 %v123
    %v157 = vunpack.c.l.b16 %v124
    %v158 = vunpack.c.l.b16 %v125
    %v159 = vunpack.c.l.b16 %v126
    %v160 = vunpack.c.l.b16 %v127
    %v161 = vunpack.c.l.b16 %v128
    %v162 = vunpack.c.l.b16 %v129
    %v163 = vunpack.c.l.b16 %v130
    %v164 = vunpack.c.l.b16 %v131
    %v165 = vunpack.c.l.b16 %v132
    %v166 = vunpack.c.l.b16 %v133
    %v167 = vunpack.c.l.b16 %v134
    %v168 = vunpack.c.l.b16 %v135
    %v169 = vunpack.c.l.b16 %v136
    %v170 = vpack.c.b16 %v155, %v154
    %v171 = vpack.c.b16 %v157, %v156
    %v172 = vpack.c.b16 %v159, %v158
    %v173 = vpack.c.b16 %v161, %v160
    %v174 = vpack.c.b16 %v163, %v162
    %v175 = vpack.c.b16 %v165, %v164
    %v176 = vpack.c.b16 %v167, %v166
    %v177 = vpack.c.b16 %v169, %v168
    %186 = vmatprep.subr.bf16.mxu0 0
    %187 = vmatpush1.bf16.msra.mxu0 %v170
    %188 = vmatprep.subr.bf16.mxu0 0
    %189 = vmatpush1.bf16.msra.mxu0 %v171
    %190 = vmatprep.subr.bf16.mxu0 0
    %191 = vmatpush1.bf16.msra.mxu0 %v172
    %192 = vmatprep.subr.bf16.mxu0 0
    %193 = vmatpush1.bf16.msra.mxu0 %v173
    %194 = vmatprep.subr.bf16.mxu0 0
    %195 = vmatpush1.bf16.msra.mxu0 %v174
    %196 = vmatprep.subr.bf16.mxu0 0
    %197 = vmatpush1.bf16.msra.mxu0 %v175
    %198 = vmatprep.subr.bf16.mxu0 0
    %199 = vmatpush1.bf16.msra.mxu0 %v176
    %200 = vmatprep.subr.bf16.mxu0 0
    %201 = vmatpush1.bf16.msra.mxu0 %v177
    %202 = vmatprep.subr.bf16.mxu0 0
    %203 = vmatpush1.bf16.msra.mxu0 0
    %204 = vmatprep.subr.bf16.mxu0 0
    %205 = vmatpush1.bf16.msra.mxu0 0
    %206 = vmatprep.subr.bf16.mxu0 0
    %207 = vmatpush1.bf16.msra.mxu0 0
    %208 = vmatprep.subr.bf16.mxu0 0
    %209 = vmatpush1.bf16.msra.mxu0 0
    %210 = vmatprep.subr.bf16.mxu0 0
    %211 = vmatpush1.bf16.msra.mxu0 0
    %212 = vmatprep.subr.bf16.mxu0 0
    %213 = vmatpush1.bf16.msra.mxu0 0
    %214 = vmatprep.subr.bf16.mxu0 0
    %215 = vmatpush1.bf16.msra.mxu0 0
    %216 = vmatprep.subr.bf16.mxu0 0
    %217 = vmatpush1.bf16.msra.mxu0 0
    %218 = vmatprep.mubr.bf16.mxu0 0
    %219 = vmatmul.mubr.bf16.gmra.mrb[0].mxu0 %v120
    %v220 = vpop.f32.mrb[0].mxu0
    %v221 = vadd.f32 %v137, %v220
    %v222 = vpop.f32.mrb[0].mxu0
    %v223 = vpop.f32.mrb[0].mxu0
    %v224 = vpop.f32.mrb[0].mxu0
    %225 = vdwg.mxu0
    %226 = vst [vmem:[#allocation10] sm:$0x1] %v221
    // Predicated region
    $region34: #{tpu_custom_call.1} parent=1 // pred_check
      _
    $region35: #{tpu_custom_call.1} parent=1 // pred_check_branch
      %228 = sbr.rel (0) target = $region37
    $region36: #{tpu_custom_call.1} parent=1 // pred_region
      %s230 = ssub.s32 16, 16
      %231 = vsyncadd [#allocation9], %s230
      %s233 = sshll.u32 [#allocation10], 4
      %s234 = int_to_ptr.vmem [resolvable:$true] %s233
      %236 = dma.vmem_to_hbm [thread:$0]  %s234, 16, %s4, [#allocation9]
    $region37: #{tpu_custom_call.1} parent=1 // pred_fallthru
      _
    // Predicated region
    $region38: #{tpu_custom_call.1} parent=1 // pred_check
      _
    $region39: #{tpu_custom_call.1} parent=1 // pred_check_branch
      %238 = sbr.rel (0) target = $region41
    $region40: #{tpu_custom_call.1} parent=1 // pred_region
      %239 = dma.done [#allocation9], 16
    $region41: #{tpu_custom_call.1} parent=1 // pred_fallthru
      _
    %240 = vsyncpa [#allocation8], 1
    %241 = vsyncpa [#allocation9], 1
  %242 = vsyncmov [#allocation4]
  %s243 = vpop.sfrf %242
  %p244 = scmp.eq.s32.totalorder %s243, 0
  %p245 = pneg %p244
  %247 = shalt.err (%p245)
  %s248 = scalar_lea.sflag [#allocation4], 1
  %249 = vsyncmov %s248
  %s250 = vpop.sfrf %249
  %p251 = scmp.eq.s32.totalorder %s250, 0
  %p252 = pneg %p251
  %254 = shalt.err (%p252)
  %s255 = scalar_lea.sflag [#allocation4], 2
  %256 = vsyncmov %s255
  %s257 = vpop.sfrf %256
  %p258 = scmp.eq.s32.totalorder %s257, 0
  %p259 = pneg %p258
  %261 = shalt.err (%p259)
  %s262 = scalar_lea.sflag [#allocation4], 3
  %263 = vsyncmov %s262
  %s264 = vpop.sfrf %263
  %p265 = scmp.eq.s32.totalorder %s264, 0
  %p266 = pneg %p265
  %268 = shalt.err (%p266)

</llo_original>
